<compile_context>
chip_gen: v7x
topology: tpu7x:2x2x1
jax: 0.10.0
libtpu: 0.0.40
codegen_flags: <defaults>
</compile_context>

<pallas_src>
import math

import jax
import jax.numpy as jnp
from jax.experimental import pallas as pl
from jax.experimental.pallas import tpu as pltpu


def _fwse_kernel(x_ref, w1_ref, b1_ref, w2_ref, b2_ref, o_ref):
    """Bb batch elements per grid step, native (Bb, C, F, T) layout.

    x_ref  : (Bb, C, F, T)   activation slab (contiguous HBM block)
    w1_ref : (F, nf)         squeeze weight, stored (in, out)
    b1_ref : (1, nf)         squeeze bias
    w2_ref : (F, nf)         excitation weight, stored (out, in)
    b2_ref : (F, 1)          excitation bias
    o_ref  : (Bb, C, F, T)
    """
    x = x_ref[...]                                               # (Bb, C, F, T)
    inv_n = jnp.float32(1.0 / (x.shape[1] * x.shape[3]))         # 1/(C*T), static

    # Frequency-wise statistics in f32: lane (T) reduce, then VPU adds over C.
    m = jnp.sum(x.astype(jnp.float32), axis=3, keepdims=True)    # (Bb, C, F, 1)
    m = jnp.sum(m, axis=1) * inv_n                               # (Bb, F, 1)

    # squeeze -> ReLU as a VPU mat-vec: broadcast-multiply + sublane reduce.
    h = jnp.sum(w1_ref[...][None, :, :] * m, axis=1) + b1_ref[...]   # (Bb, nf)
    h = jnp.maximum(h, 0.0)

    # excitation -> sigmoid as a VPU mat-vec: broadcast-multiply + lane reduce.
    z = jnp.sum(w2_ref[...][None, :, :] * h[:, None, :], axis=2,
                keepdims=True) + b2_ref[...][None, :, :]             # (Bb, F, 1)
    s = jax.nn.sigmoid(z)                                            # (Bb, F, 1)

    # Rescale in the activation dtype (exact for f32; bf16 VALU on v6e/v7x).
    # s is constant across C and T -> dense, unmasked stores along T.
    o_ref[...] = x * s[:, None, :, :].astype(x.dtype)


def fwse_block(x, w1, b1, w2, b2, *, donate_input=False):
    """x: (B, C, F, T); returns the same shape/dtype as x."""
    B, C, F, T = x.shape

    itemsize = jnp.dtype(x.dtype).itemsize
    slab_bytes = C * F * T * itemsize                     # one batch element
    param_bytes = sum(int(a.size) * jnp.dtype(a.dtype).itemsize
                      for a in (w1, b1, w2, b2))
    headroom = 4 << 20                                    # Mosaic internals

    # Per-generation VMEM cap: ~48 MiB on v7x (64 MiB physical), ~100 MiB on
    # v5e/v6e (128 MiB physical).
    try:
        phys_vmem = int(pltpu.get_tpu_info().vmem_capacity_bytes)
    except Exception:
        phys_vmem = 64 << 20                              # conservative (v7x)
    vmem_cap = max(32 << 20, min(phys_vmem - (16 << 20), 100 << 20))

    def fits(bb):
        # Double-buffered input + output blocks, resident params, headroom.
        return 4 * bb * slab_bytes + param_bytes + headroom <= vmem_cap

    # Pick Bb: keep >= ~8 grid steps (>=3-4 per TC on a 2-TC megacore) while
    # packing enough batch elements per step to amortize per-step overhead,
    # and never exceed the VMEM cap.
    target_steps = 8
    bb = B // target_steps if B >= target_steps else 1
    bb = max(1, min(bb, B))
    while bb > 1 and (B % bb != 0 or not fits(bb)):
        bb -= 1
    if not fits(1):
        # TODO(synk): T-tiled two-pass scheme (stats pass accumulating partial
        # sums, then rescale pass) for slabs whose double-buffered blocks
        # exceed the per-generation VMEM cap; fall through with a raised limit.
        pass

    vmem_need = 4 * bb * slab_bytes + param_bytes + headroom
    vmem_limit = int(min(max(vmem_need, 32 << 20), vmem_cap))

    grid = (B // bb,)

    call = pl.pallas_call(
        _fwse_kernel,
        out_shape=jax.ShapeDtypeStruct((B, C, F, T), x.dtype),
        grid_spec=pltpu.PrefetchScalarGridSpec(
            num_scalar_prefetch=0,
            grid=grid,
            in_specs=[
                # Native-layout activation slab: contiguous (bb, C, F, T) DMA.
                pl.BlockSpec((bb, C, F, T), lambda b: (b, 0, 0, 0)),
                # Params: constant block index -> VMEM-resident, no per-step DMA.
                pl.BlockSpec(w1.shape, lambda b: (0, 0)),
                pl.BlockSpec(b1.shape, lambda b: (0, 0)),
                pl.BlockSpec(w2.shape, lambda b: (0, 0)),
                pl.BlockSpec(b2.shape, lambda b: (0, 0)),
            ],
            out_specs=pl.BlockSpec((bb, C, F, T), lambda b: (b, 0, 0, 0)),
        ),
        compiler_params=pltpu.CompilerParams(
            dimension_semantics=("parallel",),   # shard B across TCs (v7x megacore)
            vmem_limit_bytes=vmem_limit,
        ),
        # Only safe when the caller donates x (buffer is overwritten in place).
        input_output_aliases={0: 0} if donate_input else {},
    )
    return call(x, w1, b1, w2, b2)


def init_fwse_params(key, num_freq, num_feats):
    """nn.Linear-style uniform(-1/sqrt(fan_in), +1/sqrt(fan_in)) init.

    Layouts chosen for the kernel's VPU mat-vecs:
      w1: (num_freq, num_feats)  == squeeze.weight.T      (in, out)
      b1: (1, num_feats)         == squeeze.bias[None]
      w2: (num_freq, num_feats)  == exitation.weight      (out, in)
      b2: (num_freq, 1)          == exitation.bias[:, None]
    """
    k1, k2, k3, k4 = jax.random.split(key, 4)
    bound1 = 1.0 / math.sqrt(num_freq)
    bound2 = 1.0 / math.sqrt(num_feats)
    w1 = jax.random.uniform(k1, (num_freq, num_feats), jnp.float32, -bound1, bound1)
    b1 = jax.random.uniform(k2, (1, num_feats), jnp.float32, -bound1, bound1)
    w2 = jax.random.uniform(k3, (num_freq, num_feats), jnp.float32, -bound2, bound2)
    b2 = jax.random.uniform(k4, (num_freq, 1), jnp.float32, -bound2, bound2)
    return w1, b1, w2, b2


def fwse_reference(x, w1, b1, w2, b2):
    """Pure-JAX reference matching the PyTorch forward exactly."""
    m = jnp.mean(x, axis=(1, 3))                          # (B, F)
    h = jnp.maximum(m @ w1 + b1, 0.0)                     # (B, num_feats)
    s = jax.nn.sigmoid(h @ w2.T + b2[:, 0][None, :])      # (B, F)
    return x * s[:, None, :, None]


if __name__ == "__main__":
    key = jax.random.PRNGKey(0)
    kx, kp = jax.random.split(key)

    B, C, num_freq, T = 2, 4, 16, 16   # (B, C, F, T)
    num_feats = 32

    x = jax.random.normal(kx, (B, C, num_freq, T), dtype=jnp.float32)
    w1, b1, w2, b2 = init_fwse_params(kp, num_freq, num_feats)

    fwse = jax.jit(fwse_block)
    out = jax.block_until_ready(fwse(x, w1, b1, w2, b2))

    ref = fwse_reference(x, w1, b1, w2, b2)
    assert out.shape == x.shape and out.dtype == x.dtype
    assert jnp.allclose(out, ref, atol=1e-5, rtol=1e-5), "mismatch vs reference"

    print("KERNEL_OK")
</pallas_src>

<mosaic_0001>
module attributes {stable_mosaic.version = 11 : i64} {
  func.func @_fwse_kernel(%arg0: i32, %arg1: memref<1x4x16x16xf32, #tpu.memory_space<vmem>>, %arg2: memref<16x32xf32, #tpu.memory_space<vmem>>, %arg3: memref<1x32xf32, #tpu.memory_space<vmem>>, %arg4: memref<16x32xf32, #tpu.memory_space<vmem>>, %arg5: memref<16x1xf32, #tpu.memory_space<vmem>>, %arg6: memref<1x4x16x16xf32, #tpu.memory_space<vmem>>) attributes {dimension_semantics = [#tpu.dimension_semantics<parallel>], iteration_bounds = array<i64: 2>, scalar_prefetch = 0 : i64, scratch_operands = 0 : i64, tpu.core_type = #tpu.core_type<tc>, window_params = [{transform_indices = @transform_0, window_bounds = array<i64: 1, 4, 16, 16>}, {pipeline_mode = #tpu.pipeline_mode<synchronous>, transform_indices = @transform_1, window_bounds = array<i64: 16, 32>}, {pipeline_mode = #tpu.pipeline_mode<synchronous>, transform_indices = @transform_2, window_bounds = array<i64: 1, 32>}, {pipeline_mode = #tpu.pipeline_mode<synchronous>, transform_indices = @transform_3, window_bounds = array<i64: 16, 32>}, {pipeline_mode = #tpu.pipeline_mode<synchronous>, transform_indices = @transform_4, window_bounds = array<i64: 16, 1>}, {transform_indices = @transform_5, window_bounds = array<i64: 1, 4, 16, 16>}]} {
    %c0 = arith.constant 0 : index
    %c0_0 = arith.constant 0 : index
    %c0_1 = arith.constant 0 : index
    %c0_2 = arith.constant 0 : index
    %0 = vector.load %arg1[%c0, %c0_0, %c0_1, %c0_2] : memref<1x4x16x16xf32, #tpu.memory_space<vmem>>, vector<1x4x16x16xf32>
    %cst = arith.constant dense<0.000000e+00> : vector<1x4x16xf32>
    %1 = vector.multi_reduction <add>, %0, %cst [3] : vector<1x4x16x16xf32> to vector<1x4x16xf32>
    %2 = vector.shape_cast %1 : vector<1x4x16xf32> to vector<1x4x16x1xf32>
    %cst_3 = arith.constant dense<0.000000e+00> : vector<1x16x1xf32>
    %3 = vector.multi_reduction <add>, %2, %cst_3 [1] : vector<1x4x16x1xf32> to vector<1x16x1xf32>
    %cst_4 = arith.constant 1.562500e-02 : f32
    %4 = vector.broadcast %cst_4 : f32 to vector<1x16x1xf32>
    %5 = arith.mulf %3, %4 : vector<1x16x1xf32>
    %c0_5 = arith.constant 0 : index
    %c0_6 = arith.constant 0 : index
    %6 = vector.load %arg2[%c0_5, %c0_6] : memref<16x32xf32, #tpu.memory_space<vmem>>, vector<16x32xf32>
    %7 = vector.shape_cast %6 : vector<16x32xf32> to vector<1x16x32xf32>
    %8 = vector.broadcast %5 : vector<1x16x1xf32> to vector<1x16x32xf32>
    %9 = arith.mulf %7, %8 : vector<1x16x32xf32>
    %cst_7 = arith.constant dense<0.000000e+00> : vector<1x32xf32>
    %10 = vector.multi_reduction <add>, %9, %cst_7 [1] : vector<1x16x32xf32> to vector<1x32xf32>
    %c0_8 = arith.constant 0 : index
    %c0_9 = arith.constant 0 : index
    %11 = vector.load %arg3[%c0_8, %c0_9] : memref<1x32xf32, #tpu.memory_space<vmem>>, vector<1x32xf32>
    %12 = arith.addf %10, %11 : vector<1x32xf32>
    %cst_10 = arith.constant 0.000000e+00 : f32
    %13 = vector.broadcast %cst_10 : f32 to vector<1x32xf32>
    %14 = arith.maximumf %12, %13 : vector<1x32xf32>
    %c0_11 = arith.constant 0 : index
    %c0_12 = arith.constant 0 : index
    %15 = vector.load %arg4[%c0_11, %c0_12] : memref<16x32xf32, #tpu.memory_space<vmem>>, vector<16x32xf32>
    %16 = vector.shape_cast %15 : vector<16x32xf32> to vector<1x16x32xf32>
    %17 = vector.shape_cast %14 : vector<1x32xf32> to vector<1x1x32xf32>
    %18 = vector.broadcast %17 : vector<1x1x32xf32> to vector<1x16x32xf32>
    %19 = arith.mulf %16, %18 : vector<1x16x32xf32>
    %cst_13 = arith.constant dense<0.000000e+00> : vector<1x16xf32>
    %20 = vector.multi_reduction <add>, %19, %cst_13 [2] : vector<1x16x32xf32> to vector<1x16xf32>
    %21 = vector.shape_cast %20 : vector<1x16xf32> to vector<1x16x1xf32>
    %c0_14 = arith.constant 0 : index
    %c0_15 = arith.constant 0 : index
    %22 = vector.load %arg5[%c0_14, %c0_15] : memref<16x1xf32, #tpu.memory_space<vmem>>, vector<16x1xf32>
    %23 = vector.shape_cast %22 : vector<16x1xf32> to vector<1x16x1xf32>
    %24 = arith.addf %21, %23 : vector<1x16x1xf32>
    %25 = arith.negf %24 : vector<1x16x1xf32>
    %26 = math.exp %25 : vector<1x16x1xf32>
    %cst_16 = arith.constant 1.000000e+00 : f32
    %27 = vector.broadcast %cst_16 : f32 to vector<1x16x1xf32>
    %28 = arith.addf %27, %26 : vector<1x16x1xf32>
    %29 = arith.divf %27, %28 : vector<1x16x1xf32>
    %30 = vector.shape_cast %29 : vector<1x16x1xf32> to vector<1x1x16x1xf32>
    %31 = vector.broadcast %30 : vector<1x1x16x1xf32> to vector<1x4x16x16xf32>
    %32 = arith.mulf %0, %31 : vector<1x4x16x16xf32>
    %c0_17 = arith.constant 0 : index
    %c0_18 = arith.constant 0 : index
    %c0_19 = arith.constant 0 : index
    %c0_20 = arith.constant 0 : index
    %33 = vector.load %arg6[%c0_17, %c0_18, %c0_19, %c0_20] : memref<1x4x16x16xf32, #tpu.memory_space<vmem>>, vector<1x4x16x16xf32>
    tpu.vector_store %arg6[%c0_17, %c0_18, %c0_19, %c0_20], %32 {strides = array<i32>} : memref<1x4x16x16xf32, #tpu.memory_space<vmem>>, vector<1x4x16x16xf32>,
    return
  }
  func.func @transform_0(%arg0: i32) -> (i32, i32, i32, i32) {
    %c0_i32 = arith.constant 0 : i32
    %c0_i32_0 = arith.constant 0 : i32
    %c0_i32_1 = arith.constant 0 : i32
    %c0_i32_2 = arith.constant 0 : i32
    return %arg0, %c0_i32, %c0_i32_0, %c0_i32_1 : i32, i32, i32, i32
  }
  func.func @transform_1(%arg0: i32) -> (i32, i32) {
    %c0_i32 = arith.constant 0 : i32
    %c0_i32_0 = arith.constant 0 : i32
    %c0_i32_1 = arith.constant 0 : i32
    return %c0_i32, %c0_i32_0 : i32, i32
  }
  func.func @transform_2(%arg0: i32) -> (i32, i32) {
    %c0_i32 = arith.constant 0 : i32
    %c0_i32_0 = arith.constant 0 : i32
    %c0_i32_1 = arith.constant 0 : i32
    return %c0_i32, %c0_i32_0 : i32, i32
  }
  func.func @transform_3(%arg0: i32) -> (i32, i32) {
    %c0_i32 = arith.constant 0 : i32
    %c0_i32_0 = arith.constant 0 : i32
    %c0_i32_1 = arith.constant 0 : i32
    return %c0_i32, %c0_i32_0 : i32, i32
  }
  func.func @transform_4(%arg0: i32) -> (i32, i32) {
    %c0_i32 = arith.constant 0 : i32
    %c0_i32_0 = arith.constant 0 : i32
    %c0_i32_1 = arith.constant 0 : i32
    return %c0_i32, %c0_i32_0 : i32, i32
  }
  func.func @transform_5(%arg0: i32) -> (i32, i32, i32, i32) {
    %c0_i32 = arith.constant 0 : i32
    %c0_i32_0 = arith.constant 0 : i32
    %c0_i32_1 = arith.constant 0 : i32
    %c0_i32_2 = arith.constant 0 : i32
    return %arg0, %c0_i32, %c0_i32_0, %c0_i32_1 : i32, i32, i32, i32
  }
}

</mosaic_0001>

<llo_original>
// kernel: fwse_block.1
$region0: #{fwse_block.1}
  #allocation0 [shape = 'u32[]', space=smem, size = 0x4, offset = 0x4, fixed_abs, tag = 'smem constant byte address 0x4 - core index']
  #allocation1 [shape = 'u32[144,128]{1,0:T(1,128)}', space=vmem, size = 0x12000, scoped, tag = 'internal scratch']
  %s0 = inlined_call_operand.hbm [shape: f32[2,4,16,16], index: 0, kind: input, shape index: {}]
  %s1 = inlined_call_operand.vmem [shape: f32[16,32], index: 1, kind: input, shape index: {}]
  %s2 = inlined_call_operand.vmem [shape: f32[1,32], index: 2, kind: input, shape index: {}]
  %s3 = inlined_call_operand.hbm [shape: f32[16,32], index: 3, kind: input, shape index: {}]
  %s4 = inlined_call_operand.vmem [shape: f32[16,1], index: 4, kind: input, shape index: {}]
  %s5 = inlined_call_operand.hbm [shape: f32[2,4,16,16], index: 5, kind: output, shape index: {}]
  %s6 = sld [smem:[#allocation0]]
  $region61: #{fwse_block.1} parent=0
    _
  %s8 = ssub.s32 1, %s6
  %s9 = scalar_select 0, %s8, %s6
  $region1: #{fwse_block.1} parent=0
    #allocation2 [shape = 'u8[65536]{0}', space=vmem, size = 0x10000, scoped, tag = 'input window, operand 0']
    #allocation3 [shape = 's32[2]{0}', space=sflag, size = 0x8, scoped, tag = 'scoped memory for fwse_block.1']
    #allocation4 [shape = 's32[2]{0}', space=sflag, size = 0x8, scoped, tag = 'scoped memory for fwse_block.1']
    #allocation5 [shape = 'u8[8192]{0}', space=vmem, size = 0x2000, scoped, tag = 'input window, operand 3, single buffered']
    #allocation6 [shape = 's32[1]{0}', space=sflag, size = 0x4, scoped, tag = 'scoped memory for fwse_block.1']
    #allocation7 [shape = 'u8[65536]{0}', space=vmem, size = 0x10000, scoped, tag = 'output window, operand 0']
    %10 = vsyncpa [#allocation3], 0
    %s11 = scalar_lea.sflag [#allocation3], 1
    %12 = vsyncpa %s11, 0
    %13 = vsyncpa [#allocation6], 0
    %14 = vsyncpa [#allocation4], 0
    %s15 = scalar_lea.sflag [#allocation4], 1
    %16 = vsyncpa %s15, 0
    loop: start=0, step=1, limit=4
    $region2: #{fwse_block.1} parent=1 // loop_pre_header
      _
    $region3: #{fwse_block.1} parent=1 // loop_header
      %s18 = sphi 0, %s22
      %p19 = scmp.ge.s32.totalorder %s18, 4
      %s28 = sphi 0, %s30
      %s31 = sphi 0, %s28
      %s32 = sphi 0, %s31
      %s48 = sphi 0, %s32
      %s52 = sphi 0, %s52
      %s54 = sphi 0, %s52
      %s55 = sphi 0, %s54
      %s69 = sphi 0, %s55
      %s73 = sphi 0, %s73
      %s75 = sphi 0, %s73
      %s76 = sphi 0, %s75
      %s90 = sphi 0, %s76
      %s94 = sphi 0, %s94
      %s96 = sphi 0, %s94
      %s97 = sphi 0, %s96
      %s111 = sphi 0, %s97
      %s115 = sphi 0, %s115
      %s117 = sphi 0, %s115
      %s118 = sphi 0, %s117
      %s132 = sphi 0, %s118
      %s138 = sphi 0, %s140
      %s141 = sphi 0, %s138
      %s142 = sphi 0, %s141
      %s158 = sphi 0, %s142
    $region4: #{fwse_block.1} parent=1 // loop_header_branch
      %21 = sbr.rel (%p19) target = $region8
    $region5: #{fwse_block.1} parent=1 // loop_body
      %s23 = ssub.s32 %s18, 1
      %s24 = ssub.s32 %s18, 2
      %s25 = sadd.s32 %s18, 1
      %s26 = ssub.s32 %s18, %s25
      %p27 = scmp.eq.s32.totalorder %s26, 0
      %s29 = sadd.s32 %s28, 1
      %s30 = scalar_select %p27, %s28, %s29
      %p33 = pneg %p27
      %p34 = scmp.eq.s32.totalorder %s18, 1
      %p35 = por %p33, %p34
      %p36 = scmp.ne.s32.totalorder %s28, %s31
      %p37 = scmp.eq.s32.totalorder %s18, 0
      %p38 = por %p36, %p37
      %p39 = scmp.ne.s32.totalorder %s28, %s31
      %p40 = scmp.eq.s32.totalorder %s23, 1
      %p41 = por %p39, %p40
      %p42 = scmp.ne.s32.totalorder %s31, %s32
      %p43 = scmp.eq.s32.totalorder %s23, 0
      %p44 = por %p42, %p43
      %p45 = scmp.ne.s32.totalorder %s31, %s32
      %p46 = scmp.eq.s32.totalorder %s24, 1
      %p47 = por %p45, %p46
      %p49 = scmp.ne.s32.totalorder %s32, %s48
      %p50 = scmp.eq.s32.totalorder %s24, 0
      %p51 = por %p49, %p50
      %s53 = sadd.s32 %s52, 1
      %p56 = scmp.eq.s32.totalorder %s18, 1
      %p57 = scmp.ne.s32.totalorder %s52, %s54
      %p58 = scmp.eq.s32.totalorder %s18, 0
      %p59 = por %p57, %p58
      %p60 = scmp.ne.s32.totalorder %s52, %s54
      %p61 = scmp.eq.s32.totalorder %s23, 1
      %p62 = por %p60, %p61
      %p63 = scmp.ne.s32.totalorder %s54, %s55
      %p64 = scmp.eq.s32.totalorder %s23, 0
      %p65 = por %p63, %p64
      %p66 = scmp.ne.s32.totalorder %s54, %s55
      %p67 = scmp.eq.s32.totalorder %s24, 1
      %p68 = por %p66, %p67
      %p70 = scmp.ne.s32.totalorder %s55, %s69
      %p71 = scmp.eq.s32.totalorder %s24, 0
      %p72 = por %p70, %p71
      %s74 = sadd.s32 %s73, 1
      %p77 = scmp.eq.s32.totalorder %s18, 1
      %p78 = scmp.ne.s32.totalorder %s73, %s75
      %p79 = scmp.eq.s32.totalorder %s18, 0
      %p80 = por %p78, %p79
      %p81 = scmp.ne.s32.totalorder %s73, %s75
      %p82 = scmp.eq.s32.totalorder %s23, 1
      %p83 = por %p81, %p82
      %p84 = scmp.ne.s32.totalorder %s75, %s76
      %p85 = scmp.eq.s32.totalorder %s23, 0
      %p86 = por %p84, %p85
      %p87 = scmp.ne.s32.totalorder %s75, %s76
      %p88 = scmp.eq.s32.totalorder %s24, 1
      %p89 = por %p87, %p88
      %p91 = scmp.ne.s32.totalorder %s76, %s90
      %p92 = scmp.eq.s32.totalorder %s24, 0
      %p93 = por %p91, %p92
      %s95 = sadd.s32 %s94, 1
      %p98 = scmp.eq.s32.totalorder %s18, 1
      %p99 = scmp.ne.s32.totalorder %s94, %s96
      %p100 = scmp.eq.s32.totalorder %s18, 0
      %p101 = por %p99, %p100
      %p102 = scmp.ne.s32.totalorder %s94, %s96
      %p103 = scmp.eq.s32.totalorder %s23, 1
      %p104 = por %p102, %p103
      %p105 = scmp.ne.s32.totalorder %s96, %s97
      %p106 = scmp.eq.s32.totalorder %s23, 0
      %p107 = por %p105, %p106
      %p108 = scmp.ne.s32.totalorder %s96, %s97
      %p109 = scmp.eq.s32.totalorder %s24, 1
      %p110 = por %p108, %p109
      %p112 = scmp.ne.s32.totalorder %s97, %s111
      %p113 = scmp.eq.s32.totalorder %s24, 0
      %p114 = por %p112, %p113
      %s116 = sadd.s32 %s115, 1
      %p119 = scmp.eq.s32.totalorder %s18, 1
      %p120 = scmp.ne.s32.totalorder %s115, %s117
      %p121 = scmp.eq.s32.totalorder %s18, 0
      %p122 = por %p120, %p121
      %p123 = scmp.ne.s32.totalorder %s115, %s117
      %p124 = scmp.eq.s32.totalorder %s23, 1
      %p125 = por %p123, %p124
      %p126 = scmp.ne.s32.totalorder %s117, %s118
      %p127 = scmp.eq.s32.totalorder %s23, 0
      %p128 = por %p126, %p127
      %p129 = scmp.ne.s32.totalorder %s117, %s118
      %p130 = scmp.eq.s32.totalorder %s24, 1
      %p131 = por %p129, %p130
      %p133 = scmp.ne.s32.totalorder %s118, %s132
      %p134 = scmp.eq.s32.totalorder %s24, 0
      %p135 = por %p133, %p134
      %s136 = ssub.s32 %s18, %s25
      %p137 = scmp.eq.s32.totalorder %s136, 0
      %s139 = sadd.s32 %s138, 1
      %s140 = scalar_select %p137, %s138, %s139
      %p143 = pneg %p137
      %p144 = scmp.eq.s32.totalorder %s18, 1
      %p145 = por %p143, %p144
      %p146 = scmp.ne.s32.totalorder %s138, %s141
      %p147 = scmp.eq.s32.totalorder %s18, 0
      %p148 = por %p146, %p147
      %p149 = scmp.ne.s32.totalorder %s138, %s141
      %p150 = scmp.eq.s32.totalorder %s23, 1
      %p151 = por %p149, %p150
      %p152 = scmp.ne.s32.totalorder %s141, %s142
      %p153 = scmp.eq.s32.totalorder %s23, 0
      %p154 = por %p152, %p153
      %p155 = scmp.ne.s32.totalorder %s141, %s142
      %p156 = scmp.eq.s32.totalorder %s24, 1
      %p157 = por %p155, %p156
      %p159 = scmp.ne.s32.totalorder %s142, %s158
      %p160 = scmp.eq.s32.totalorder %s24, 0
      %p161 = por %p159, %p160
      %p162 = scmp.le.s32.totalorder 1, %s18
      %p163 = scmp.lt.s32.totalorder %s18, 3
      %p164 = pnand %p162, %p163
      %p165 = pneg %p164
      // Predicated region
      $region9: #{fwse_block.1} parent=5 // pred_check
        _
      $region10: #{fwse_block.1} parent=5 // pred_check_branch
        %167 = sbr.rel (%p164) target = $region12
      $region11: #{fwse_block.1} parent=5 // pred_region
        %s168 = ssub.s32 %s18, 1
        // Predicated region
        $region13: #{fwse_block.1} parent=11 // pred_check
          %p169 = pneg %p65
        $region14: #{fwse_block.1} parent=11 // pred_check_branch
          %171 = sbr.rel (%p169) target = $region16
        $region15: #{fwse_block.1} parent=11 // pred_region
          _
        $region16: #{fwse_block.1} parent=11 // pred_fallthru
          _
        // Predicated region
        $region17: #{fwse_block.1} parent=11 // pred_check
          %p172 = pneg %p86
        $region18: #{fwse_block.1} parent=11 // pred_check_branch
          %174 = sbr.rel (%p172) target = $region20
        $region19: #{fwse_block.1} parent=11 // pred_region
          _
        $region20: #{fwse_block.1} parent=11 // pred_fallthru
          _
        // Predicated region
        $region21: #{fwse_block.1} parent=11 // pred_check
          %p175 = pneg %p107
        $region22: #{fwse_block.1} parent=11 // pred_check_branch
          %177 = sbr.rel (%p175) target = $region24
        $region23: #{fwse_block.1} parent=11 // pred_region
          %s179 = ssub.s32 256, 256
          %180 = vsyncadd [#allocation6], %s179
          %s181 = sshll.u32 [#allocation5], 4
          %s182 = int_to_ptr.vmem [resolvable:$true] %s181
          %187 = dma.hbm_to_vmem [thread:$0]  %s3, 256, %s182, [#allocation6], 128, 128, 8
        $region24: #{fwse_block.1} parent=11 // pred_fallthru
          _
        // Predicated region
        $region25: #{fwse_block.1} parent=11 // pred_check
          %p188 = pneg %p128
        $region26: #{fwse_block.1} parent=11 // pred_check_branch
          %190 = sbr.rel (%p188) target = $region28
        $region27: #{fwse_block.1} parent=11 // pred_region
          _
        $region28: #{fwse_block.1} parent=11 // pred_fallthru
          _
      $region12: #{fwse_block.1} parent=5 // pred_fallthru
        _
      %p191 = scmp.lt.s32.totalorder %s18, 2
      // Predicated region
      $region29: #{fwse_block.1} parent=5 // pred_check
        %p192 = pneg %p191
      $region30: #{fwse_block.1} parent=5 // pred_check_branch
        %194 = sbr.rel (%p192) target = $region32
      $region31: #{fwse_block.1} parent=5 // pred_region
        // Predicated region
        $region33: #{fwse_block.1} parent=31 // pred_check
          %p195 = pneg %p38
        $region34: #{fwse_block.1} parent=31 // pred_check_branch
          %197 = sbr.rel (%p195) target = $region36
        $region35: #{fwse_block.1} parent=31 // pred_region
          %s198 = sand.u32 %s28, 1
          %s199 = scalar_lea.sflag [#allocation3], %s198
          %s200 = sand.u32 %s28, 1
          %s201 = smul.addr %s200, 64
          %s202 = scalar_lea.vmem [#allocation2], %s201
          %s204 = ssub.s32 1024, 1024
          %205 = vsyncadd %s199, %s204
          %s206 = smul.addr %s18, 8
          %s207 = smul.addr %s206, 128
          %s208 = scalar_lea.hbm %s0, %s207
          %s209 = sshll.u32 %s202, 4
          %s210 = int_to_ptr.vmem [resolvable:$true] %s209
          %215 = dma.hbm_to_vmem [thread:$0]  %s208, 1024, %s210, %s199, 128, 128, 8
        $region36: #{fwse_block.1} parent=31 // pred_fallthru
          _
      $region32: #{fwse_block.1} parent=5 // pred_fallthru
        _
      %p216 = scmp.le.s32.totalorder 1, %s18
      %p217 = scmp.lt.s32.totalorder %s18, 3
      %p218 = pnand %p216, %p217
      %p219 = pneg %p218
      // Predicated region
      $region37: #{fwse_block.1} parent=5 // pred_check
        _
      $region38: #{fwse_block.1} parent=5 // pred_check_branch
        %221 = sbr.rel (%p218) target = $region40
      $region39: #{fwse_block.1} parent=5 // pred_region
        %s222 = ssub.s32 %s18, 1
        %s223 = sand.u32 %s31, 1
        %s224 = scalar_lea.sflag [#allocation3], %s223
        %s225 = sand.u32 %s31, 1
        %s226 = smul.addr %s225, 64
        %s227 = scalar_lea.vmem [#allocation2], %s226
        // Predicated region
        $region41: #{fwse_block.1} parent=39 // pred_check
          %p228 = pneg %p44
        $region42: #{fwse_block.1} parent=39 // pred_check_branch
          %230 = sbr.rel (%p228) target = $region44
        $region43: #{fwse_block.1} parent=39 // pred_region
          %231 = dma.done %s224, 1024
        $region44: #{fwse_block.1} parent=39 // pred_fallthru
          _
        // Predicated region
        $region45: #{fwse_block.1} parent=39 // pred_check
          %p232 = pneg %p107
        $region46: #{fwse_block.1} parent=39 // pred_check_branch
          %234 = sbr.rel (%p232) target = $region48
        $region47: #{fwse_block.1} parent=39 // pred_region
          %235 = dma.done [#allocation6], 256
        $region48: #{fwse_block.1} parent=39 // pred_fallthru
          _
        %s236 = sand.u32 %s31, 1
        %s237 = scalar_lea.sflag [#allocation3], %s236
        %s238 = sand.u32 %s31, 1
        %s239 = smul.addr %s238, 64
        %s240 = scalar_lea.vmem [#allocation2], %s239
        %p241 = pneg %p44
        %p242 = pneg %p41
        %p243 = pneg %p65
        %p244 = pneg %p62
        %p245 = pneg %p86
        %p246 = pneg %p83
        %p247 = pneg %p107
        %p248 = pneg %p104
        %p249 = pneg %p128
        %p250 = pneg %p125
        %p251 = pneg %p154
        %p252 = pneg %p151
        %s253 = sand.u32 %s141, 1
        %s254 = scalar_lea.sflag [#allocation4], %s253
        %s255 = sand.u32 %s141, 1
        %s256 = smul.addr %s255, 64
        %s257 = scalar_lea.vmem [#allocation7], %s256
        %v258 = vld [vmem:[%s227] sm:$0xff]
        %v259 = vld [vmem:[%s227 + $0x8] sm:$0xff]
        %v260 = vld [vmem:[%s227 + $0x10] sm:$0xff]
        %v261 = vld [vmem:[%s227 + $0x18] sm:$0xff]
        %v262 = vld [vmem:[%s227 + $0x20] sm:$0xff]
        %v263 = vld [vmem:[%s227 + $0x28] sm:$0xff]
        %v264 = vld [vmem:[%s227 + $0x30] sm:$0xff]
        %v265 = vld [vmem:[%s227 + $0x38] sm:$0xff]
        %vm266 = vcmask 130048
        %v267 = vsel %vm266, %v258, 0.0
        %268 = vadd.xlane.f32.xlu0 %v267
        %v269 = vpop.xlane.xlu0 %268
        %v270 = vsel %vm266, %v259, 0.0
        %271 = vadd.xlane.f32.xlu0 %v270
        %v272 = vpop.xlane.xlu0 %271
        %v273 = vsel %vm266, %v260, 0.0
        %274 = vadd.xlane.f32.xlu0 %v273
        %v275 = vpop.xlane.xlu0 %274
        %v276 = vsel %vm266, %v261, 0.0
        %277 = vadd.xlane.f32.xlu0 %v276
        %v278 = vpop.xlane.xlu0 %277
        %v279 = vsel %vm266, %v262, 0.0
        %280 = vadd.xlane.f32.xlu0 %v279
        %v281 = vpop.xlane.xlu0 %280
        %v282 = vsel %vm266, %v263, 0.0
        %283 = vadd.xlane.f32.xlu0 %v282
        %v284 = vpop.xlane.xlu0 %283
        %v285 = vsel %vm266, %v264, 0.0
        %286 = vadd.xlane.f32.xlu0 %v285
        %v287 = vpop.xlane.xlu0 %286
        %v288 = vsel %vm266, %v265, 0.0
        %289 = vadd.xlane.f32.xlu0 %v288
        %v290 = vpop.xlane.xlu0 %289
        %v291 = vadd.f32 %v269, %v275
        %v292 = vadd.f32 %v291, %v281
        %v293 = vadd.f32 %v292, %v287
        %v294 = vadd.f32 %v272, %v278
        %v295 = vadd.f32 %v294, %v284
        %v296 = vadd.f32 %v295, %v290
        %v297 = vmul.f32 %v293, 0.015625
        %v298 = vmul.f32 %v296, 0.015625
        %v299 = vld [vmem:[%s1] sm:$0xff]
        %v300 = vld [vmem:[%s1 + $0x8] sm:$0xff]
        %v301 = vmul.f32 %v299, %v297
        %v302 = vmul.f32 %v300, %v298
        %vm303 = vcmask 261120
        %v304 = vsel %vm303, %v301, 0.0
        %v305 = vsel %vm303, %v302, 0.0
        %v306 = vadd.f32 %v304, %v305
        %v307 = vrot.slane %v306, 4
        %v308 = vadd.f32 %v306, %v307
        %v309 = vrot.slane %v308, 2
        %v310 = vadd.f32 %v308, %v309
        %v311 = vrot.slane %v310, 1
        %v312 = vadd.f32 %v310, %v311
        %v313 = vld [vmem:[%s2] sm:$0x1]
        %v314 = vadd.f32 %v312, %v313
        %v315 = vmax.f32 %v314, 0.0
        %v316 = vld [vmem:[#allocation5] sm:$0xff]
        %v317 = vld [vmem:[#allocation5 + $0x8] sm:$0xff]
        %v318 = vlaneseq
        %v319 = vshrl.u32 %v318, 7
        %v320 = vsub.s32 0, %v319
        %v321 = vrot.slane %v315, %v320
        %v322 = vmul.f32 %v316, %v321
        %v323 = vmul.f32 %v317, %v321
        %v324 = vsel %vm303, %v322, 0.0
        %325 = vadd.xlane.f32.xlu0 %v324
        %v326 = vpop.xlane.xlu0 %325
        %v327 = vsel %vm303, %v323, 0.0
        %328 = vadd.xlane.f32.xlu0 %v327
        %v329 = vpop.xlane.xlu0 %328
        %v330 = vld [vmem:[%s4] sm:$0xff]
        %v331 = vld [vmem:[%s4 + $0x8] sm:$0xff]
        %v332 = vadd.f32 %v326, %v330
        %v333 = vadd.f32 %v329, %v331
        %v334 = vxor.u32 %v332, 2147483648
        %v335 = vxor.u32 %v333, 2147483648
        %v336 = vmul.f32 %v334, 1.442695
        %v337 = vpow.pop %v336
        %v338 = vmul.f32 %v335, 1.442695
        %v339 = vpow.pop %v338
        %v340 = vadd.f32 %v337, 1.0
        %v341 = vadd.f32 %v339, 1.0
        %v342 = vrcp.pop %v340
        %v343 = vmul.f32 1.0, %v342
        %v344 = vrcp.pop %v341
        %v345 = vmul.f32 1.0, %v344
        %347 = vset.pattern.permute.xlu0 0
        %348 = vperm.xlu0 %347, %v343
        %v349 = vpop.permute.xlu0 %348
        %352 = vset.pattern.permute.xlu0 0
        %353 = vperm.xlu0 %352, %v345
        %v354 = vpop.permute.xlu0 %353
        %v356 = vmul.f32 %v258, %v349
        %v357 = vmul.f32 %v259, %v354
        %v358 = vmul.f32 %v260, %v349
        %v359 = vmul.f32 %v261, %v354
        %v360 = vmul.f32 %v262, %v349
        %v361 = vmul.f32 %v263, %v354
        %v362 = vmul.f32 %v264, %v349
        %v363 = vmul.f32 %v265, %v354
        %364 = vst.msk [vmem:[%s257] sm:$0xff] %vm266, %v356
        %365 = vst.msk [vmem:[%s257 + $0x8] sm:$0xff] %vm266, %v357
        %366 = vst.msk [vmem:[%s257 + $0x10] sm:$0xff] %vm266, %v358
        %367 = vst.msk [vmem:[%s257 + $0x18] sm:$0xff] %vm266, %v359
        %368 = vst.msk [vmem:[%s257 + $0x20] sm:$0xff] %vm266, %v360
        %369 = vst.msk [vmem:[%s257 + $0x28] sm:$0xff] %vm266, %v361
        %370 = vst.msk [vmem:[%s257 + $0x30] sm:$0xff] %vm266, %v362
        %371 = vst.msk [vmem:[%s257 + $0x38] sm:$0xff] %vm266, %v363
        %s372 = sand.u32 %s141, 1
        %s373 = scalar_lea.sflag [#allocation4], %s372
        %s374 = sand.u32 %s141, 1
        %s375 = smul.addr %s374, 64
        %s376 = scalar_lea.vmem [#allocation7], %s375
        // Predicated region
        $region49: #{fwse_block.1} parent=39 // pred_check
          %p377 = pneg %p151
        $region50: #{fwse_block.1} parent=39 // pred_check_branch
          %379 = sbr.rel (%p377) target = $region52
        $region51: #{fwse_block.1} parent=39 // pred_region
          %s381 = ssub.s32 1024, 1024
          %382 = vsyncadd %s373, %s381
          %s383 = smul.addr %s23, 8
          %s384 = smul.addr %s383, 128
          %s385 = scalar_lea.hbm %s5, %s384
          %s386 = sshll.u32 %s376, 4
          %s387 = int_to_ptr.vmem [resolvable:$true] %s386
          %392 = dma.vmem_to_hbm [thread:$0]  %s387, 1024, %s385, %s373, 128, 128, 8
        $region52: #{fwse_block.1} parent=39 // pred_fallthru
          _
      $region40: #{fwse_block.1} parent=5 // pred_fallthru
        _
      %p393 = scmp.le.s32.totalorder 2, %s18
      // Predicated region
      $region53: #{fwse_block.1} parent=5 // pred_check
        %p394 = pneg %p393
      $region54: #{fwse_block.1} parent=5 // pred_check_branch
        %396 = sbr.rel (%p394) target = $region56
      $region55: #{fwse_block.1} parent=5 // pred_region
        %s397 = ssub.s32 %s18, 2
        // Predicated region
        $region57: #{fwse_block.1} parent=55 // pred_check
          %p398 = pneg %p157
        $region58: #{fwse_block.1} parent=55 // pred_check_branch
          %400 = sbr.rel (%p398) target = $region60
        $region59: #{fwse_block.1} parent=55 // pred_region
          %s401 = sand.u32 %s142, 1
          %s402 = scalar_lea.sflag [#allocation4], %s401
          %s403 = sand.u32 %s142, 1
          %s404 = smul.addr %s403, 64
          %s405 = scalar_lea.vmem [#allocation7], %s404
          %406 = dma.done %s402, 1024
        $region60: #{fwse_block.1} parent=55 // pred_fallthru
          _
      $region56: #{fwse_block.1} parent=5 // pred_fallthru
        _
    $region6: #{fwse_block.1} parent=1 // loop_footer
      %s22 = sadd.s32 1, %s18
    $region7: #{fwse_block.1} parent=1 // loop_footer_branch
      %17 = sbr.rel target = $region3
    $region8: #{fwse_block.1} parent=1 // loop_exit
      _
    %407 = vsyncpa [#allocation3], 1
    %s408 = scalar_lea.sflag [#allocation3], 1
    %409 = vsyncpa %s408, 1
    %410 = vsyncpa [#allocation6], 1
    %411 = vsyncpa [#allocation4], 1
    %s412 = scalar_lea.sflag [#allocation4], 1
    %413 = vsyncpa %s412, 1

</llo_original>
